<compile_context>
chip_gen: v5e
topology: v5e:2x2
jax: 0.10.0
libtpu: 0.0.40
codegen_flags: <defaults>
</compile_context>

<pallas_src>
import functools

import jax
import jax.numpy as jnp
from jax import lax
from jax.experimental import pallas as pl
from jax.experimental.pallas import tpu as pltpu


# --------------------------------------------------------------------------
# Kernels
# --------------------------------------------------------------------------

def _resident_kernel(scal_ref, x_ref, w_ref, b_ref, y_ref, mbn_ref, vbn_ref,
                     *, eps):
    """Whole (N, C) array resident in VMEM: one pass, centered variances."""
    x = x_ref[...].astype(jnp.float32)                      # (n, c) logical
    n, c = x.shape

    # BatchNorm stats (over rows).
    mean_bn = jnp.sum(x, axis=0, keepdims=True) * (1.0 / n)
    xb = x - mean_bn
    var_bn = jnp.sum(xb * xb, axis=0, keepdims=True) * (1.0 / (n - 1))

    # LayerNorm stats (over features).
    mean_ln = jnp.sum(x, axis=1, keepdims=True) * (1.0 / c)
    xl = x - mean_ln
    var_ln = jnp.sum(xl * xl, axis=1, keepdims=True) * (1.0 / (c - 1))

    mw0 = scal_ref[0]
    mw1 = scal_ref[1]
    vw0 = scal_ref[2]
    vw1 = scal_ref[3]

    mean = mw0 * mean_ln + mw1 * mean_bn
    var = vw0 * var_ln + vw1 * var_bn

    # rsqrt runs on the EUP (its own VLIW slot) instead of sqrt+divide on VALU.
    x_hat = (x - mean) * lax.rsqrt(var + eps)
    y_ref[...] = (x_hat * w_ref[...].astype(jnp.float32)
                  + b_ref[...].astype(jnp.float32)).astype(y_ref.dtype)
    mbn_ref[...] = mean_bn
    vbn_ref[...] = var_bn


def _stats_kernel(x_ref, psum_ref, psq_ref, *, n, tile_n, tiles_per_group,
                  needs_mask):
    """Per-column sum / sum-of-squares partials.

    Grid = (num_groups, tiles_per_group); the leading axis is 'parallel' so a
    v7x megacore can give each TensorCore its own group of row tiles; each
    group accumulates into its own (1, 1, C) output block (output residency
    across the 'arbitrary' tile axis).
    """
    p = pl.program_id(0)
    i = pl.program_id(1)

    @pl.when(i == 0)
    def _init():
        psum_ref[...] = jnp.zeros_like(psum_ref)
        psq_ref[...] = jnp.zeros_like(psq_ref)

    x = x_ref[...].astype(jnp.float32)                      # (tile_n, c)
    if needs_mask:
        # Last tile may be partially / fully out of bounds (garbage rows on
        # read); zero them so the BN sums stay exact.
        row0 = (p * tiles_per_group + i) * tile_n
        rows = row0 + lax.broadcasted_iota(jnp.int32, (tile_n, 1), 0)
        x = jnp.where(rows < n, x, 0.0)

    # Cross-sublane reduce (XLU); kernel is HBM-bound so this is off the
    # critical path.  (Could be an (8, C) partial-accumulator or ones@x MXU
    # matmul if a bundle dump ever shows the XLU slot binding.)
    psum_ref[...] += jnp.sum(x, axis=0, keepdims=True)[None]
    psq_ref[...] += jnp.sum(x * x, axis=0, keepdims=True)[None]


def _normalize_kernel(scal_ref, mbn_ref, vbn_ref, x_ref, w_ref, b_ref, y_ref,
                      *, eps, c):
    """Row-tile-parallel normalize pass; BN stats precomputed (1, C) inputs."""
    x = x_ref[...].astype(jnp.float32)                      # (tile_n, c)

    # LayerNorm stats, centered (two-pass within the resident tile).
    mean_ln = jnp.sum(x, axis=1, keepdims=True) * (1.0 / c)
    xc = x - mean_ln
    var_ln = jnp.sum(xc * xc, axis=1, keepdims=True) * (1.0 / (c - 1))

    mw0 = scal_ref[0]
    mw1 = scal_ref[1]
    vw0 = scal_ref[2]
    vw1 = scal_ref[3]

    mean = mw0 * mean_ln + mw1 * mbn_ref[...]
    var = vw0 * var_ln + vw1 * vbn_ref[...]

    x_hat = (x - mean) * lax.rsqrt(var + eps)
    y_ref[...] = (x_hat * w_ref[...].astype(jnp.float32)
                  + b_ref[...].astype(jnp.float32)).astype(y_ref.dtype)


# --------------------------------------------------------------------------
# Wrapper
# --------------------------------------------------------------------------

def _round_up(v, m):
    return ((v + m - 1) // m) * m


def _sublane(dtype):
    isz = jnp.dtype(dtype).itemsize
    return max(8, 32 // max(isz, 1))      # 8 (f32), 16 (bf16), 32 (int8/fp8)


def _vmem_limit_bytes():
    """Generation-aware scoped-VMEM request (v5e/v6e: 128 MiB phys, v7x: 64)."""
    cap = 64 * 1024 * 1024                # conservative fallback = v7x VMEM
    try:
        cap = int(getattr(pltpu.get_tpu_info(), "vmem_capacity_bytes", cap))
    except Exception:
        pass
    return max(32 << 20, min(cap - (16 << 20), 96 << 20))


def _row_tile(n, c, dtype, max_tile_n, vmem_limit):
    """Pick the streaming row-tile size (dtype- and generation-aware)."""
    sub = _sublane(dtype)
    isz = jnp.dtype(dtype).itemsize
    c_pad = _round_up(c, 128)             # byte accounting only (no padding)
    n_pad = _round_up(n, sub)
    # Per row: x-in + y-out double-buffered blocks in x dtype + ~3 f32 temps.
    per_row = c_pad * (4 * isz + 3 * 4)
    budget = max(1 << 20, min(32 << 20, vmem_limit // 2))
    max_rows = max(sub, (budget // per_row) // sub * sub)
    mt = max(sub, (max_tile_n // sub) * sub)
    return min(max_rows, mt, n_pad)


def _normalize_call(scal, mean_bn, var_bn, x, weight, bias, *, eps, tile_n,
                    vmem_limit):
    n, c = x.shape
    n_tiles = pl.cdiv(n, tile_n)
    kernel = functools.partial(_normalize_kernel, eps=eps, c=c)
    return pl.pallas_call(
        kernel,
        out_shape=jax.ShapeDtypeStruct((n, c), x.dtype),
        grid_spec=pltpu.PrefetchScalarGridSpec(
            num_scalar_prefetch=0,
            grid=(n_tiles,),
            in_specs=[
                pl.BlockSpec(memory_space=pltpu.MemorySpace.SMEM),   # scal (4,)
                pl.BlockSpec((1, c), lambda i: (0, 0)),              # mean_bn
                pl.BlockSpec((1, c), lambda i: (0, 0)),              # var_bn
                pl.BlockSpec((tile_n, c), lambda i: (i, 0)),         # x tile
                pl.BlockSpec((1, c), lambda i: (0, 0)),              # weight
                pl.BlockSpec((1, c), lambda i: (0, 0)),              # bias
            ],
            out_specs=pl.BlockSpec((tile_n, c), lambda i: (i, 0)),
        ),
        compiler_params=pltpu.CompilerParams(
            dimension_semantics=("parallel",),        # row tiles independent
            vmem_limit_bytes=vmem_limit),
    )(scal, mean_bn, var_bn, x, weight, bias)


def switchnorm1d_forward(x, weight, bias, mean_weight, var_weight,
                         running_mean, running_var,
                         eps=1e-5, momentum=0.997,
                         training=True, using_moving_average=True,
                         max_tile_n=2048, force_streaming=False):
    """Pallas SwitchNorm1d forward. Returns (y, new_running_mean, new_running_var)."""
    n, c = x.shape
    isz = jnp.dtype(x.dtype).itemsize
    sub = _sublane(x.dtype)
    c_pad = _round_up(c, 128)
    n_pad = _round_up(n, sub)

    # Tiny parameter glue: 2-element softmaxes of the mixing weights -> SMEM.
    mw = jax.nn.softmax(mean_weight.astype(jnp.float32), axis=0)
    vw = jax.nn.softmax(var_weight.astype(jnp.float32), axis=0)
    scal = jnp.concatenate([mw, vw], axis=0)                        # f32[4]

    vmem_limit = _vmem_limit_bytes()

    if not training:
        # Eval: normalize with the running buffers, no buffer update.
        mean_bn = running_mean.astype(jnp.float32).reshape(1, c)
        var_bn = running_var.astype(jnp.float32).reshape(1, c)
        tile_n = _row_tile(n, c, x.dtype, max_tile_n, vmem_limit)
        y = _normalize_call(scal, mean_bn, var_bn, x, weight, bias,
                            eps=eps, tile_n=tile_n, vmem_limit=vmem_limit)
        return y, running_mean, running_var

    # ---- training: batch statistics -------------------------------------
    # Rough in-VMEM working set of the single-pass resident kernel:
    # x/y blocks (2 buffers each, x dtype) + ~4 tile-sized f32 intermediates.
    resident_bytes = n_pad * c_pad * (4 * isz + 4 * 4)
    use_resident = (not force_streaming) and resident_bytes <= int(vmem_limit * 0.85)

    if use_resident:
        kernel = functools.partial(_resident_kernel, eps=eps)
        y, mean_bn, var_bn = pl.pallas_call(
            kernel,
            out_shape=(
                jax.ShapeDtypeStruct((n, c), x.dtype),
                jax.ShapeDtypeStruct((1, c), jnp.float32),
                jax.ShapeDtypeStruct((1, c), jnp.float32),
            ),
            grid_spec=pltpu.PrefetchScalarGridSpec(
                num_scalar_prefetch=0,
                grid=(1,),
                in_specs=[
                    pl.BlockSpec(memory_space=pltpu.MemorySpace.SMEM),  # scal
                    pl.BlockSpec((n, c), lambda i: (0, 0)),             # x
                    pl.BlockSpec((1, c), lambda i: (0, 0)),             # weight
                    pl.BlockSpec((1, c), lambda i: (0, 0)),             # bias
                ],
                out_specs=(
                    pl.BlockSpec((n, c), lambda i: (0, 0)),             # y
                    pl.BlockSpec((1, c), lambda i: (0, 0)),             # mean_bn
                    pl.BlockSpec((1, c), lambda i: (0, 0)),             # var_bn
                ),
            ),
            compiler_params=pltpu.CompilerParams(
                dimension_semantics=("arbitrary",),
                vmem_limit_bytes=vmem_limit),
        )(scal, x, weight, bias)
    else:
        # ---- streaming pass 1: per-column sum / sum-of-squares ----------
        tile_n = _row_tile(n, c, x.dtype, max_tile_n, vmem_limit)
        n_tiles = pl.cdiv(n, tile_n)
        num_groups = 2 if n_tiles >= 2 else 1        # v7x: one group per TC
        tiles_per_group = pl.cdiv(n_tiles, num_groups)
        needs_mask = (num_groups * tiles_per_group * tile_n != n)

        stats_kernel = functools.partial(
            _stats_kernel, n=n, tile_n=tile_n,
            tiles_per_group=tiles_per_group, needs_mask=needs_mask)

        def x_stats_map(p, i):
            # Clamp so fully-OOB tiles (odd tile counts / group padding) stay
            # in range; their contribution is zeroed by the in-kernel mask.
            return (jnp.minimum(p * tiles_per_group + i, n_tiles - 1), 0)

        psum, psq = pl.pallas_call(
            stats_kernel,
            out_shape=(
                jax.ShapeDtypeStruct((num_groups, 1, c), jnp.float32),
                jax.ShapeDtypeStruct((num_groups, 1, c), jnp.float32),
            ),
            grid_spec=pltpu.PrefetchScalarGridSpec(
                num_scalar_prefetch=0,
                grid=(num_groups, tiles_per_group),
                in_specs=[pl.BlockSpec((tile_n, c), x_stats_map)],
                out_specs=(
                    pl.BlockSpec((1, 1, c), lambda p, i: (p, 0, 0)),
                    pl.BlockSpec((1, 1, c), lambda p, i: (p, 0, 0)),
                ),
            ),
            compiler_params=pltpu.CompilerParams(
                dimension_semantics=("parallel", "arbitrary"),
                vmem_limit_bytes=vmem_limit),
        )(x)

        # BN-stat finalization hoisted out of the kernels (tiny (1, C) math).
        colsum = jnp.sum(psum, axis=0)                                # (1, c)
        colsq = jnp.sum(psq, axis=0)
        mean_bn = colsum * (1.0 / n)
        # One-pass formula can cancel catastrophically for |mean| >> std;
        # clamp at 0 so rsqrt(var + eps) stays finite.
        var_bn = jnp.maximum((colsq - n * mean_bn * mean_bn) / (n - 1), 0.0)

        # ---- streaming pass 2: normalize (row-tile parallel) ------------
        y = _normalize_call(scal, mean_bn, var_bn, x, weight, bias,
                            eps=eps, tile_n=tile_n, vmem_limit=vmem_limit)

    # Running-stat buffer update (PyTorch side effect) -> returned functionally.
    if using_moving_average:
        new_rm = running_mean * momentum + (1.0 - momentum) * mean_bn
        new_rv = running_var * momentum + (1.0 - momentum) * var_bn
    else:
        new_rm = running_mean + mean_bn
        new_rv = running_var + mean_bn ** 2 + var_bn

    return y, new_rm, new_rv


# --------------------------------------------------------------------------
# Pure-JAX references & self-test
# --------------------------------------------------------------------------

def _reference_forward(x, weight, bias, mean_weight, var_weight,
                       running_mean, running_var,
                       eps=1e-5, momentum=0.997, using_moving_average=True):
    """Mirrors the PyTorch forward in training mode."""
    xf = x.astype(jnp.float32)
    n, c = xf.shape
    mean_ln = jnp.mean(xf, axis=1, keepdims=True)
    var_ln = jnp.sum((xf - mean_ln) ** 2, axis=1, keepdims=True) / (c - 1)
    mean_bn = jnp.mean(xf, axis=0, keepdims=True)
    var_bn = jnp.sum((xf - mean_bn) ** 2, axis=0, keepdims=True) / (n - 1)
    mw = jax.nn.softmax(mean_weight.astype(jnp.float32), axis=0)
    vw = jax.nn.softmax(var_weight.astype(jnp.float32), axis=0)
    mean = mw[0] * mean_ln + mw[1] * mean_bn
    var = vw[0] * var_ln + vw[1] * var_bn
    x_hat = (xf - mean) / jnp.sqrt(var + eps)
    y = x_hat * weight + bias
    if using_moving_average:
        new_rm = running_mean * momentum + (1.0 - momentum) * mean_bn
        new_rv = running_var * momentum + (1.0 - momentum) * var_bn
    else:
        new_rm = running_mean + mean_bn
        new_rv = running_var + mean_bn ** 2 + var_bn
    return y, new_rm, new_rv


def _reference_eval(x, weight, bias, mean_weight, var_weight, rm, rv, eps=1e-5):
    xf = x.astype(jnp.float32)
    n, c = xf.shape
    mean_ln = jnp.mean(xf, axis=1, keepdims=True)
    var_ln = jnp.sum((xf - mean_ln) ** 2, axis=1, keepdims=True) / (c - 1)
    mw = jax.nn.softmax(mean_weight.astype(jnp.float32), axis=0)
    vw = jax.nn.softmax(var_weight.astype(jnp.float32), axis=0)
    mean = mw[0] * mean_ln + mw[1] * rm
    var = vw[0] * var_ln + vw[1] * rv
    return (xf - mean) / jnp.sqrt(var + eps) * weight + bias


if __name__ == "__main__":
    def _make_inputs(batch, num_features, random_params):
        key = jax.random.PRNGKey(0)
        kx, kw, kb, km, kv = jax.random.split(key, 5)
        x = jax.random.normal(kx, (batch, num_features), dtype=jnp.float32)
        if random_params:
            weight = jax.random.normal(kw, (1, num_features), dtype=jnp.float32)
            bias = jax.random.normal(kb, (1, num_features), dtype=jnp.float32)
            mean_weight = jax.random.normal(km, (2,), dtype=jnp.float32)
            var_weight = jax.random.normal(kv, (2,), dtype=jnp.float32)
        else:
            weight = jnp.ones((1, num_features), dtype=jnp.float32)
            bias = jnp.zeros((1, num_features), dtype=jnp.float32)
            mean_weight = jnp.ones((2,), dtype=jnp.float32)
            var_weight = jnp.ones((2,), dtype=jnp.float32)
        running_mean = jnp.zeros((1, num_features), dtype=jnp.float32)
        running_var = jnp.zeros((1, num_features), dtype=jnp.float32)
        return x, weight, bias, mean_weight, var_weight, running_mean, running_var

    def _run_train_case(batch, num_features, random_params, **kw):
        args = _make_inputs(batch, num_features, random_params)
        y, rm, rv = switchnorm1d_forward(*args, eps=1e-5, momentum=0.997,
                                         training=True,
                                         using_moving_average=True, **kw)
        jax.block_until_ready((y, rm, rv))
        y_ref, rm_ref, rv_ref = _reference_forward(*args)
        assert jnp.allclose(y, y_ref, atol=1e-4, rtol=1e-4), \
            f"y mismatch at ({batch},{num_features},{kw})"
        assert jnp.allclose(rm, rm_ref, atol=1e-5, rtol=1e-4), \
            f"running_mean mismatch at ({batch},{num_features},{kw})"
        assert jnp.allclose(rv, rv_ref, atol=1e-5, rtol=1e-4), \
            f"running_var mismatch at ({batch},{num_features},{kw})"

    # Resident single-pass path (module default-ish shape, deterministic params).
    _run_train_case(batch=8, num_features=32, random_params=False)
    # Resident path, ragged N and C, random params.
    _run_train_case(batch=37, num_features=200, random_params=True)
    # Streaming path with ragged last tile (masked stats, partial writes).
    _run_train_case(batch=37, num_features=200, random_params=True,
                    force_streaming=True, max_tile_n=16)
    # Streaming path, fully aligned tiles (2 groups x 2 tiles of 16 rows).
    _run_train_case(batch=64, num_features=256, random_params=True,
                    force_streaming=True, max_tile_n=16)

    # Eval path: normalize with (non-trivial) running buffers.
    x, w, b, mwp, vwp, _, _ = _make_inputs(16, 48, random_params=True)
    key = jax.random.PRNGKey(0)
    rm = jax.random.normal(key, (1, 48), dtype=jnp.float32) * 0.1
    rv = jnp.abs(jax.random.normal(jax.random.split(key)[0], (1, 48),
                                   dtype=jnp.float32)) + 0.5
    y_eval, _, _ = switchnorm1d_forward(x, w, b, mwp, vwp, rm, rv,
                                        eps=1e-5, training=False)
    jax.block_until_ready(y_eval)
    y_eval_ref = _reference_eval(x, w, b, mwp, vwp, rm, rv, eps=1e-5)
    assert jnp.allclose(y_eval, y_eval_ref, atol=1e-4, rtol=1e-4), "eval mismatch"

    print("KERNEL_OK")
</pallas_src>

<mosaic_0001>
module attributes {stable_mosaic.version = 11 : i64} {
  func.func @_resident_kernel(%arg0: i32, %arg1: memref<4xf32, #tpu.memory_space<smem>>, %arg2: memref<8x32xf32, #tpu.memory_space<vmem>>, %arg3: memref<1x32xf32, #tpu.memory_space<vmem>>, %arg4: memref<1x32xf32, #tpu.memory_space<vmem>>, %arg5: memref<8x32xf32, #tpu.memory_space<vmem>>, %arg6: memref<1x32xf32, #tpu.memory_space<vmem>>, %arg7: memref<1x32xf32, #tpu.memory_space<vmem>>) attributes {dimension_semantics = [#tpu.dimension_semantics<arbitrary>], iteration_bounds = array<i64: 1>, scalar_prefetch = 0 : i64, scratch_operands = 0 : i64, tpu.core_type = #tpu.core_type<tc>, window_params = [{transform_indices = @transform_0, window_bounds = array<i64: 4>}, {pipeline_mode = #tpu.pipeline_mode<synchronous>, transform_indices = @transform_1, window_bounds = array<i64: 8, 32>}, {pipeline_mode = #tpu.pipeline_mode<synchronous>, transform_indices = @transform_2, window_bounds = array<i64: 1, 32>}, {pipeline_mode = #tpu.pipeline_mode<synchronous>, transform_indices = @transform_3, window_bounds = array<i64: 1, 32>}, {pipeline_mode = #tpu.pipeline_mode<synchronous>, transform_indices = @transform_4, window_bounds = array<i64: 8, 32>}, {pipeline_mode = #tpu.pipeline_mode<synchronous>, transform_indices = @transform_5, window_bounds = array<i64: 1, 32>}, {pipeline_mode = #tpu.pipeline_mode<synchronous>, transform_indices = @transform_6, window_bounds = array<i64: 1, 32>}]} {
    %c0 = arith.constant 0 : index
    %c0_0 = arith.constant 0 : index
    %0 = vector.load %arg2[%c0, %c0_0] : memref<8x32xf32, #tpu.memory_space<vmem>>, vector<8x32xf32>
    %cst = arith.constant dense<0.000000e+00> : vector<32xf32>
    %1 = vector.multi_reduction <add>, %0, %cst [0] : vector<8x32xf32> to vector<32xf32>
    %2 = vector.shape_cast %1 : vector<32xf32> to vector<1x32xf32>
    %cst_1 = arith.constant 1.250000e-01 : f32
    %3 = vector.broadcast %cst_1 : f32 to vector<1x32xf32>
    %4 = arith.mulf %2, %3 : vector<1x32xf32>
    %5 = vector.broadcast %4 : vector<1x32xf32> to vector<8x32xf32>
    %6 = arith.subf %0, %5 : vector<8x32xf32>
    %7 = arith.mulf %6, %6 : vector<8x32xf32>
    %cst_2 = arith.constant dense<0.000000e+00> : vector<32xf32>
    %8 = vector.multi_reduction <add>, %7, %cst_2 [0] : vector<8x32xf32> to vector<32xf32>
    %9 = vector.shape_cast %8 : vector<32xf32> to vector<1x32xf32>
    %cst_3 = arith.constant 0.142857149 : f32
    %10 = vector.broadcast %cst_3 : f32 to vector<1x32xf32>
    %11 = arith.mulf %9, %10 : vector<1x32xf32>
    %cst_4 = arith.constant dense<0.000000e+00> : vector<8xf32>
    %12 = vector.multi_reduction <add>, %0, %cst_4 [1] : vector<8x32xf32> to vector<8xf32>
    %13 = vector.shape_cast %12 : vector<8xf32> to vector<8x1xf32>
    %cst_5 = arith.constant 3.125000e-02 : f32
    %14 = vector.broadcast %cst_5 : f32 to vector<8x1xf32>
    %15 = arith.mulf %13, %14 : vector<8x1xf32>
    %16 = vector.broadcast %15 : vector<8x1xf32> to vector<8x32xf32>
    %17 = arith.subf %0, %16 : vector<8x32xf32>
    %18 = arith.mulf %17, %17 : vector<8x32xf32>
    %cst_6 = arith.constant dense<0.000000e+00> : vector<8xf32>
    %19 = vector.multi_reduction <add>, %18, %cst_6 [1] : vector<8x32xf32> to vector<8xf32>
    %20 = vector.shape_cast %19 : vector<8xf32> to vector<8x1xf32>
    %cst_7 = arith.constant 0.0322580636 : f32
    %21 = vector.broadcast %cst_7 : f32 to vector<8x1xf32>
    %22 = arith.mulf %20, %21 : vector<8x1xf32>
    %c0_8 = arith.constant 0 : index
    %23 = memref.load %arg1[%c0_8] : memref<4xf32, #tpu.memory_space<smem>>
    %c1 = arith.constant 1 : index
    %24 = memref.load %arg1[%c1] : memref<4xf32, #tpu.memory_space<smem>>
    %c2 = arith.constant 2 : index
    %25 = memref.load %arg1[%c2] : memref<4xf32, #tpu.memory_space<smem>>
    %c3 = arith.constant 3 : index
    %26 = memref.load %arg1[%c3] : memref<4xf32, #tpu.memory_space<smem>>
    %27 = vector.broadcast %23 : f32 to vector<8x1xf32>
    %28 = arith.mulf %27, %15 : vector<8x1xf32>
    %29 = vector.broadcast %24 : f32 to vector<1x32xf32>
    %30 = arith.mulf %29, %4 : vector<1x32xf32>
    %31 = vector.broadcast %28 : vector<8x1xf32> to vector<8x32xf32>
    %32 = vector.broadcast %30 : vector<1x32xf32> to vector<8x32xf32>
    %33 = arith.addf %31, %32 : vector<8x32xf32>
    %34 = vector.broadcast %25 : f32 to vector<8x1xf32>
    %35 = arith.mulf %34, %22 : vector<8x1xf32>
    %36 = vector.broadcast %26 : f32 to vector<1x32xf32>
    %37 = arith.mulf %36, %11 : vector<1x32xf32>
    %38 = vector.broadcast %35 : vector<8x1xf32> to vector<8x32xf32>
    %39 = vector.broadcast %37 : vector<1x32xf32> to vector<8x32xf32>
    %40 = arith.addf %38, %39 : vector<8x32xf32>
    %41 = arith.subf %0, %33 : vector<8x32xf32>
    %cst_9 = arith.constant 9.99999974E-6 : f32
    %42 = vector.broadcast %cst_9 : f32 to vector<8x32xf32>
    %43 = arith.addf %40, %42 : vector<8x32xf32>
    %44 = math.rsqrt %43 : vector<8x32xf32>
    %45 = arith.mulf %41, %44 : vector<8x32xf32>
    %c0_10 = arith.constant 0 : index
    %c0_11 = arith.constant 0 : index
    %46 = vector.load %arg3[%c0_10, %c0_11] : memref<1x32xf32, #tpu.memory_space<vmem>>, vector<1x32xf32>
    %47 = vector.broadcast %46 : vector<1x32xf32> to vector<8x32xf32>
    %48 = arith.mulf %45, %47 : vector<8x32xf32>
    %c0_12 = arith.constant 0 : index
    %c0_13 = arith.constant 0 : index
    %49 = vector.load %arg4[%c0_12, %c0_13] : memref<1x32xf32, #tpu.memory_space<vmem>>, vector<1x32xf32>
    %50 = vector.broadcast %49 : vector<1x32xf32> to vector<8x32xf32>
    %51 = arith.addf %48, %50 : vector<8x32xf32>
    %c0_14 = arith.constant 0 : index
    %c0_15 = arith.constant 0 : index
    %52 = vector.load %arg5[%c0_14, %c0_15] : memref<8x32xf32, #tpu.memory_space<vmem>>, vector<8x32xf32>
    tpu.vector_store %arg5[%c0_14, %c0_15], %51 {strides = array<i32>} : memref<8x32xf32, #tpu.memory_space<vmem>>, vector<8x32xf32>,
    %c0_16 = arith.constant 0 : index
    %c0_17 = arith.constant 0 : index
    %53 = vector.load %arg6[%c0_16, %c0_17] : memref<1x32xf32, #tpu.memory_space<vmem>>, vector<1x32xf32>
    tpu.vector_store %arg6[%c0_16, %c0_17], %4 {strides = array<i32>} : memref<1x32xf32, #tpu.memory_space<vmem>>, vector<1x32xf32>,
    %c0_18 = arith.constant 0 : index
    %c0_19 = arith.constant 0 : index
    %54 = vector.load %arg7[%c0_18, %c0_19] : memref<1x32xf32, #tpu.memory_space<vmem>>, vector<1x32xf32>
    tpu.vector_store %arg7[%c0_18, %c0_19], %11 {strides = array<i32>} : memref<1x32xf32, #tpu.memory_space<vmem>>, vector<1x32xf32>,
    return
  }
  func.func @transform_0(%arg0: i32) -> i32 {
    %c0_i32 = arith.constant 0 : i32
    %c0_i32_0 = arith.constant 0 : i32
    return %c0_i32 : i32
  }
  func.func @transform_1(%arg0: i32) -> (i32, i32) {
    %c0_i32 = arith.constant 0 : i32
    %c0_i32_0 = arith.constant 0 : i32
    %c0_i32_1 = arith.constant 0 : i32
    return %c0_i32, %c0_i32_0 : i32, i32
  }
  func.func @transform_2(%arg0: i32) -> (i32, i32) {
    %c0_i32 = arith.constant 0 : i32
    %c0_i32_0 = arith.constant 0 : i32
    %c0_i32_1 = arith.constant 0 : i32
    return %c0_i32, %c0_i32_0 : i32, i32
  }
  func.func @transform_3(%arg0: i32) -> (i32, i32) {
    %c0_i32 = arith.constant 0 : i32
    %c0_i32_0 = arith.constant 0 : i32
    %c0_i32_1 = arith.constant 0 : i32
    return %c0_i32, %c0_i32_0 : i32, i32
  }
  func.func @transform_4(%arg0: i32) -> (i32, i32) {
    %c0_i32 = arith.constant 0 : i32
    %c0_i32_0 = arith.constant 0 : i32
    %c0_i32_1 = arith.constant 0 : i32
    return %c0_i32, %c0_i32_0 : i32, i32
  }
  func.func @transform_5(%arg0: i32) -> (i32, i32) {
    %c0_i32 = arith.constant 0 : i32
    %c0_i32_0 = arith.constant 0 : i32
    %c0_i32_1 = arith.constant 0 : i32
    return %c0_i32, %c0_i32_0 : i32, i32
  }
  func.func @transform_6(%arg0: i32) -> (i32, i32) {
    %c0_i32 = arith.constant 0 : i32
    %c0_i32_0 = arith.constant 0 : i32
    %c0_i32_1 = arith.constant 0 : i32
    return %c0_i32, %c0_i32_0 : i32, i32
  }
}

</mosaic_0001>

<llo_original>
// kernel: tpu_custom_call.1
$region0: #{tpu_custom_call.1}
  #allocation0 [shape = 'u32[]', space=smem, size = 0x4, offset = 0x4, fixed_abs, tag = 'smem constant byte address 0x4 - core index']
  #allocation1 [shape = 'u32[72,128]{1,0:T(1,128)}', space=vmem, size = 0x9000, scoped, tag = 'internal scratch']
  %s0 = inlined_call_operand.hbm [shape: f32[4], index: 0, kind: input, shape index: {}]
  %s1 = inlined_call_operand.hbm [shape: f32[8,32], index: 1, kind: input, shape index: {}]
  %s2 = inlined_call_operand.vmem [shape: f32[1,32], index: 2, kind: input, shape index: {}]
  %s3 = inlined_call_operand.vmem [shape: f32[1,32], index: 3, kind: input, shape index: {}]
  %s4 = inlined_call_operand.hbm [shape: f32[8,32], index: 4, kind: output, shape index: {0}]
  %s5 = inlined_call_operand.hbm [shape: f32[1,32], index: 5, kind: output, shape index: {1}]
  %s6 = inlined_call_operand.hbm [shape: f32[1,32], index: 6, kind: output, shape index: {2}]
  %7 = xla_tuple %s4, %s5, %s6
  %s8 = sld [smem:[#allocation0]]
  $region50: #{tpu_custom_call.1} parent=0
    _
  %s10 = ssub.s32 1, %s8
  %s11 = scalar_select 0, %s10, %s8
  $region1: #{tpu_custom_call.1} parent=0
    #allocation2 [shape = 'u8[512]{0}', space=smem, size = 0x200, scoped, tag = 'input window, operand 0, single buffered']
    #allocation3 [shape = 's32[1]{0}', space=sflag, size = 0x4, scoped, tag = 'scoped memory for tpu_custom_call.1']
    #allocation4 [shape = 's32[1]{0}', space=sflag, size = 0x4, scoped, tag = 'scoped memory for tpu_custom_call.1']
    #allocation5 [shape = 's32[1]{0}', space=sflag, size = 0x4, scoped, tag = 'scoped memory for tpu_custom_call.1']
    #allocation6 [shape = 'u8[4096]{0}', space=vmem, size = 0x1000, scoped, tag = 'input window, operand 1, single buffered']
    #allocation7 [shape = 'u8[4096]{0}', space=vmem, size = 0x1000, scoped, tag = 'output window, operand 0, single buffered']
    #allocation8 [shape = 'u8[512]{0}', space=vmem, size = 0x400, scoped, tag = 'output window, operand 1, single buffered']
    #allocation9 [shape = 's32[1]{0}', space=sflag, size = 0x4, scoped, tag = 'scoped memory for tpu_custom_call.1']
    #allocation10 [shape = 'u8[512]{0}', space=vmem, size = 0x400, scoped, tag = 'output window, operand 2, single buffered']
    %12 = vsyncpa [#allocation5], 0
    %13 = vsyncpa [#allocation3], 0
    %14 = vsyncpa [#allocation4], 0
    %15 = vsyncpa [#allocation9], 0
    // Predicated region
    $region2: #{tpu_custom_call.1} parent=1 // pred_check
      _
    $region3: #{tpu_custom_call.1} parent=1 // pred_check_branch
      %17 = sbr.rel (0) target = $region5
    $region4: #{tpu_custom_call.1} parent=1 // pred_region
      %19 = vsyncadd [#allocation5], 0
      %s21 = sshll.u32 %s0, 4
      %s22 = int_to_ptr.hbm [resolvable:$true] %s21
      %24 = dma.hbm_to_smem %s22, 16, [#allocation2], [#allocation5]
    $region5: #{tpu_custom_call.1} parent=1 // pred_fallthru
      _
    // Predicated region
    $region6: #{tpu_custom_call.1} parent=1 // pred_check
      _
    $region7: #{tpu_custom_call.1} parent=1 // pred_check_branch
      %26 = sbr.rel (0) target = $region9
    $region8: #{tpu_custom_call.1} parent=1 // pred_region
      %28 = vsyncadd [#allocation3], 0
      %s30 = sshll.u32 %s1, 4
      %s31 = int_to_ptr.hbm [resolvable:$true] %s30
      %s32 = sshll.u32 [#allocation6], 4
      %s33 = int_to_ptr.vmem [resolvable:$true] %s32
      %35 = dma.hbm_to_vmem [thread:$0]  %s31, 128, %s33, [#allocation3]
    $region9: #{tpu_custom_call.1} parent=1 // pred_fallthru
      _
    // Predicated region
    $region10: #{tpu_custom_call.1} parent=1 // pred_check
      _
    $region11: #{tpu_custom_call.1} parent=1 // pred_check_branch
      %37 = sbr.rel (0) target = $region13
    $region12: #{tpu_custom_call.1} parent=1 // pred_region
      _
    $region13: #{tpu_custom_call.1} parent=1 // pred_fallthru
      _
    // Predicated region
    $region14: #{tpu_custom_call.1} parent=1 // pred_check
      _
    $region15: #{tpu_custom_call.1} parent=1 // pred_check_branch
      %39 = sbr.rel (0) target = $region17
    $region16: #{tpu_custom_call.1} parent=1 // pred_region
      _
    $region17: #{tpu_custom_call.1} parent=1 // pred_fallthru
      _
    // Predicated region
    $region18: #{tpu_custom_call.1} parent=1 // pred_check
      _
    $region19: #{tpu_custom_call.1} parent=1 // pred_check_branch
      %41 = sbr.rel (0) target = $region21
    $region20: #{tpu_custom_call.1} parent=1 // pred_region
      %43 = dma.done [#allocation5], 16
    $region21: #{tpu_custom_call.1} parent=1 // pred_fallthru
      _
    // Predicated region
    $region22: #{tpu_custom_call.1} parent=1 // pred_check
      _
    $region23: #{tpu_custom_call.1} parent=1 // pred_check_branch
      %45 = sbr.rel (0) target = $region25
    $region24: #{tpu_custom_call.1} parent=1 // pred_region
      %47 = dma.done [#allocation3], 128
    $region25: #{tpu_custom_call.1} parent=1 // pred_fallthru
      _
    %48 = sfence
    %v49 = vld [vmem:[#allocation6] sm:$0xff]
    %vm50 = vcmask 261120
    %v51 = vsel %vm50, %v49, 0.0
    %v52 = vrot.slane %v51, 4
    %v53 = vadd.f32 %v51, %v52
    %v54 = vrot.slane %v53, 2
    %v55 = vadd.f32 %v53, %v54
    %v56 = vrot.slane %v55, 1
    %v57 = vadd.f32 %v55, %v56
    %v58 = vmul.f32 %v57, 0.125
    %v59 = vsub.f32 %v49, %v58
    %v60 = vmul.f32 %v59, %v59
    %v61 = vsel %vm50, %v60, 0.0
    %v62 = vrot.slane %v61, 4
    %v63 = vadd.f32 %v61, %v62
    %v64 = vrot.slane %v63, 2
    %v65 = vadd.f32 %v63, %v64
    %v66 = vrot.slane %v65, 1
    %v67 = vadd.f32 %v65, %v66
    %v68 = vmul.f32 %v67, 0.14285715
    %69 = vadd.xlane.f32.xlu0 %v51
    %v70 = vpop.xlane.xlu0 %69
    %v71 = vmul.f32 %v70, 0.03125
    %v72 = vsub.f32 %v49, %v71
    %v73 = vmul.f32 %v72, %v72
    %v74 = vsel %vm50, %v73, 0.0
    %75 = vadd.xlane.f32.xlu0 %v74
    %v76 = vpop.xlane.xlu0 %75
    %v77 = vmul.f32 %v76, 0.032258064
    %s78 = sld [smem:[#allocation2]]
    %s79 = sld [smem:[#allocation2 + $0x1]]
    %s80 = sld [smem:[#allocation2 + $0x2]]
    %s81 = sld [smem:[#allocation2 + $0x3]]
    %v82 = vstv %s78
    %v83 = vmul.f32 %v82, %v71
    %v84 = vstv %s79
    %v85 = vmul.f32 %v84, %v58
    %v86 = vadd.f32 %v83, %v85
    %v87 = vstv %s80
    %v88 = vmul.f32 %v87, %v77
    %v89 = vstv %s81
    %v90 = vmul.f32 %v89, %v68
    %v91 = vadd.f32 %v88, %v90
    %v92 = vsub.f32 %v49, %v86
    %v93 = vadd.f32 %v91, 1e-05
    %v94 = vrsqrt.pop %v93
    %v95 = vmul.f32 %v94, %v93
    %v96 = vmul.f32 %v95, %v94
    %v97 = vmul.f32 0.5, %v96
    %v98 = vsub.f32 1.5, %v97
    %v99 = vmul.f32 %v94, %v98
    %vm100 = vweird.f32 %v93
    %vm101 = vweird.f32 %v94
    %vm102 = vmor %vm100, %vm101
    %v103 = vsel %vm102, %v94, %v99
    %v104 = vmul.f32 %v92, %v103
    %v105 = vld [vmem:[%s2] sm:$0x1]
    %v107 = vperm.slane %v105, 0
    %v109 = vmul.f32 %v104, %v107
    %v110 = vld [vmem:[%s3] sm:$0x1]
    %v112 = vperm.slane %v110, 0
    %v114 = vadd.f32 %v109, %v112
    %115 = vst.msk [vmem:[#allocation7] sm:$0xff] %vm50, %v114
    %vm116 = vcmask 253952
    %117 = vst.msk [vmem:[#allocation8] sm:$0x1] %vm116, %v58
    %118 = vst.msk [vmem:[#allocation10] sm:$0x1] %vm116, %v68
    // Predicated region
    $region26: #{tpu_custom_call.1} parent=1 // pred_check
      _
    $region27: #{tpu_custom_call.1} parent=1 // pred_check_branch
      %120 = sbr.rel (0) target = $region29
    $region28: #{tpu_custom_call.1} parent=1 // pred_region
      %122 = vsyncadd [#allocation4], 0
      %s124 = sshll.u32 [#allocation7], 4
      %s125 = int_to_ptr.vmem [resolvable:$true] %s124
      %s126 = sshll.u32 %s4, 4
      %s127 = int_to_ptr.hbm [resolvable:$true] %s126
      %129 = dma.vmem_to_hbm [thread:$0]  %s125, 128, %s127, [#allocation4]
    $region29: #{tpu_custom_call.1} parent=1 // pred_fallthru
      _
    // Predicated region
    $region30: #{tpu_custom_call.1} parent=1 // pred_check
      _
    $region31: #{tpu_custom_call.1} parent=1 // pred_check_branch
      %131 = sbr.rel (0) target = $region33
    $region32: #{tpu_custom_call.1} parent=1 // pred_region
      %133 = vsyncadd [#allocation9], 0
      %s135 = sshll.u32 [#allocation8], 4
      %s136 = int_to_ptr.vmem [resolvable:$true] %s135
      %s137 = sshll.u32 %s5, 4
      %s138 = int_to_ptr.hbm [resolvable:$true] %s137
      %140 = dma.vmem_to_hbm [thread:$0]  %s136, 16, %s138, [#allocation9]
    $region33: #{tpu_custom_call.1} parent=1 // pred_fallthru
      _
    // Predicated region
    $region34: #{tpu_custom_call.1} parent=1 // pred_check
      _
    $region35: #{tpu_custom_call.1} parent=1 // pred_check_branch
      %142 = sbr.rel (0) target = $region37
    $region36: #{tpu_custom_call.1} parent=1 // pred_region
      %144 = vsyncadd [#allocation9], 0
      %s146 = sshll.u32 [#allocation10], 4
      %s147 = int_to_ptr.vmem [resolvable:$true] %s146
      %s148 = sshll.u32 %s6, 4
      %s149 = int_to_ptr.hbm [resolvable:$true] %s148
      %151 = dma.vmem_to_hbm [thread:$0]  %s147, 16, %s149, [#allocation9]
    $region37: #{tpu_custom_call.1} parent=1 // pred_fallthru
      _
    // Predicated region
    $region38: #{tpu_custom_call.1} parent=1 // pred_check
      _
    $region39: #{tpu_custom_call.1} parent=1 // pred_check_branch
      %153 = sbr.rel (0) target = $region41
    $region40: #{tpu_custom_call.1} parent=1 // pred_region
      %155 = dma.done [#allocation4], 128
    $region41: #{tpu_custom_call.1} parent=1 // pred_fallthru
      _
    // Predicated region
    $region42: #{tpu_custom_call.1} parent=1 // pred_check
      _
    $region43: #{tpu_custom_call.1} parent=1 // pred_check_branch
      %157 = sbr.rel (0) target = $region45
    $region44: #{tpu_custom_call.1} parent=1 // pred_region
      %159 = dma.done [#allocation9], 16
    $region45: #{tpu_custom_call.1} parent=1 // pred_fallthru
      _
    // Predicated region
    $region46: #{tpu_custom_call.1} parent=1 // pred_check
      _
    $region47: #{tpu_custom_call.1} parent=1 // pred_check_branch
      %161 = sbr.rel (0) target = $region49
    $region48: #{tpu_custom_call.1} parent=1 // pred_region
      %163 = dma.done [#allocation9], 16
    $region49: #{tpu_custom_call.1} parent=1 // pred_fallthru
      _
    %164 = vsyncpa [#allocation3], 1
    %165 = vsyncpa [#allocation4], 1
    %166 = vsyncpa [#allocation9], 1
    %167 = vsyncpa [#allocation5], 1

</llo_original>
